<compile_context>
chip_gen: v6e
topology: v6e:2x2x1
jax: 0.10.0
libtpu: 0.0.40
codegen_flags: <defaults>
</compile_context>

<pallas_src>
import jax
import jax.numpy as jnp
from jax.experimental import pallas as pl
from jax.experimental.pallas import tpu as pltpu


def _round_up(a, m):
    return ((a + m - 1) // m) * m


def _cdiv(a, b):
    return (a + b - 1) // b


def match_kernel(x_ref, y_ref, w1_ref, b1_ref, w2_ref, b2_ref, o_ref):
    # x_ref, y_ref : (TB, F)     f32 or bf16 batch tile (pipelined)
    # w1_ref       : (4, F, Hp)  bf16 (resident across grid steps)
    # b1_ref       : (1, Hp)     f32
    # w2_ref       : (1, Hp)     f32
    # b2_ref       : (1, 1)      f32, SMEM scalar
    # o_ref        : (1, 1, TB)  f32, lane-dense output row
    x = x_ref[...].astype(jnp.float32)
    y = y_ref[...].astype(jnp.float32)
    diff = jnp.abs(x - y)        # elementwise kept in f32 (v5e VPU has no bf16)
    prod = x * y

    # Cast only the MXU operands to bf16; accumulate in f32.
    xb = x.astype(jnp.bfloat16)
    yb = y.astype(jnp.bfloat16)
    db = diff.astype(jnp.bfloat16)
    pb = prod.astype(jnp.bfloat16)

    # z @ W1 computed as 4 partial matmuls against the row-blocks of W1
    # (avoids materializing the concat).
    h = jnp.dot(xb, w1_ref[0], preferred_element_type=jnp.float32)
    h = h + jnp.dot(yb, w1_ref[1], preferred_element_type=jnp.float32)
    h = h + jnp.dot(db, w1_ref[2], preferred_element_type=jnp.float32)
    h = h + jnp.dot(pb, w1_ref[3], preferred_element_type=jnp.float32)
    h = jnp.maximum(h + b1_ref[...], 0.0)            # (TB, Hp), ReLU

    # Dropout(0.2) -> identity at inference.
    # N=1 projection: VPU multiply + one cross-lane reduce, then relayout the
    # (TB, 1) column to a lane-dense (1, 1, TB) row before the store.
    out_col = jnp.sum(h * w2_ref[...], axis=-1, keepdims=True) + b2_ref[0, 0]
    tb = o_ref.shape[-1]
    o_ref[...] = out_col.reshape(1, 1, tb)


def _select_tile(B, tb_max):
    """Pick (tb, nb): big tiles, but >= 2 grid steps when there is enough
    work per tile (v7x megacore), with minimal batch padding."""
    bp8 = _round_up(max(B, 1), 8)
    nb = _cdiv(bp8, tb_max)
    if nb == 1 and bp8 >= 512:
        nb = 2                                   # keep both v7x TCs busy
    tb = _round_up(_cdiv(bp8, nb), 8)
    return tb, nb


def match_forward(x, y, w1, b1, w2, b2, *, tb_max=1024):
    """x, y: (B, F) f32 (or bf16); w1: (4F, H); b1: (1, H); w2: (H, 1); b2: (1, 1)."""
    B, F = x.shape
    H = w1.shape[1]
    assert w1.shape[0] == 4 * F

    # Pad hidden dim to a lane multiple (200 -> 256); zero columns/weights
    # contribute nothing to the output.
    Hp = max(128, _round_up(H, 128))
    w1p = jnp.pad(w1, ((0, 0), (0, Hp - H))).astype(jnp.bfloat16).reshape(4, F, Hp)
    b1p = jnp.pad(b1.reshape(1, H), ((0, 0), (0, Hp - H))).astype(jnp.float32)
    w2p = jnp.pad(w2.reshape(1, H), ((0, 0), (0, Hp - H))).astype(jnp.float32)
    b2p = b2.reshape(1, 1).astype(jnp.float32)

    tb, nb = _select_tile(B, tb_max)
    Bp = nb * tb
    if Bp != B:
        x = jnp.pad(x, ((0, Bp - B), (0, 0)))
        y = jnp.pad(y, ((0, Bp - B), (0, 0)))

    in_bytes = jnp.dtype(x.dtype).itemsize
    vmem_need = (
        2 * 2 * tb * F * in_bytes        # x, y double-buffered tiles
        + 4 * F * Hp * 2                 # W1 (bf16, resident)
        + 2 * Hp * 4                     # b1, w2
        + 2 * 2 * tb * 4                 # lane-dense output, double-buffered
    )
    # Derived from tile sizes; capped at 48 MiB so the same code is safe on
    # v7x's 64 MiB/TC VMEM and still generous on v5e/v6e.
    vmem_limit = min(48 * 1024 * 1024, max(32 * 1024 * 1024, int(vmem_need * 2)))

    cost = pl.CostEstimate(
        flops=2 * Bp * (4 * F) * Hp + 6 * Bp * Hp + 4 * Bp * F,
        transcendentals=0,
        bytes_accessed=int(
            2 * Bp * F * in_bytes        # x, y
            + 4 * F * Hp * 2             # W1 (bf16)
            + (2 * Hp + 1) * 4           # b1, w2, b2
            + Bp * 4                     # output
        ),
    )

    out = pl.pallas_call(
        match_kernel,
        out_shape=jax.ShapeDtypeStruct((nb, 1, tb), jnp.float32),
        grid=(nb,),
        in_specs=[
            pl.BlockSpec((tb, F), lambda i: (i, 0)),              # x tile
            pl.BlockSpec((tb, F), lambda i: (i, 0)),              # y tile
            pl.BlockSpec((4, F, Hp), lambda i: (0, 0, 0)),        # W1 (resident)
            pl.BlockSpec((1, Hp), lambda i: (0, 0)),              # b1
            pl.BlockSpec((1, Hp), lambda i: (0, 0)),              # w2 row
            pl.BlockSpec(memory_space=pltpu.MemorySpace.SMEM),    # b2 scalar
        ],
        out_specs=pl.BlockSpec((1, 1, tb), lambda i: (i, 0, 0)),  # lane-dense
        compiler_params=pltpu.CompilerParams(
            dimension_semantics=("parallel",),
            vmem_limit_bytes=vmem_limit,
        ),
        cost_estimate=cost,
    )(x, y, w1p, b1p, w2p, b2p)
    # (nb, 1, tb) row-major == batch order; slice off the padded rows.
    return out.reshape(Bp, 1)[:B]


def match_reference(x, y, w1, b1, w2, b2):
    """Pure-JAX reference with the same numerics (bf16 matmul operands,
    f32 accumulation) as the kernel."""
    z = jnp.concatenate([x, y, jnp.abs(x - y), x * y], axis=1)
    h = jnp.dot(z.astype(jnp.bfloat16), w1.astype(jnp.bfloat16),
                preferred_element_type=jnp.float32) + b1
    h = jnp.maximum(h, 0.0)
    return jnp.dot(h, w2, preferred_element_type=jnp.float32) + b2


def init_params(name, key):
    # Match.__init__: feat_len = 1600 if name == 'rnn' else 800
    feat_len = 1600 if name == "rnn" else 800
    hidden = 200
    k1, k2, k3, k4 = jax.random.split(key, 4)
    lim1 = 1.0 / jnp.sqrt(feat_len)
    lim2 = 1.0 / jnp.sqrt(hidden)
    w1 = jax.random.uniform(k1, (feat_len, hidden), jnp.float32, -lim1, lim1)
    b1 = jax.random.uniform(k2, (1, hidden), jnp.float32, -lim1, lim1)
    w2 = jax.random.uniform(k3, (hidden, 1), jnp.float32, -lim2, lim2)
    b2 = jax.random.uniform(k4, (1, 1), jnp.float32, -lim2, lim2)
    return w1, b1, w2, b2, feat_len


if __name__ == "__main__":
    key = jax.random.PRNGKey(0)
    name = "mlp"                         # -> feat_len = 800, per-input F = 200
    kw, kx, ky, kx2, ky2 = jax.random.split(key, 5)

    w1, b1, w2, b2, feat_len = init_params(name, kw)
    F = feat_len // 4                    # per-input feature width (200)

    # Small batch (single grid tile).
    B = 8
    x = jax.random.normal(kx, (B, F), jnp.float32)
    y = jax.random.normal(ky, (B, F), jnp.float32)
    out = match_forward(x, y, w1, b1, w2, b2)
    jax.block_until_ready(out)
    ref = match_reference(x, y, w1, b1, w2, b2)
    assert out.shape == (B, 1)
    assert jnp.allclose(out, ref, atol=2e-3, rtol=2e-3), float(
        jnp.max(jnp.abs(out - ref)))

    # Larger batch exercising the multi-tile grid + batch-padding path
    # (nb = 2, tb = 752 with the default tb_max).
    B2 = 1500
    x2 = jax.random.normal(kx2, (B2, F), jnp.float32)
    y2 = jax.random.normal(ky2, (B2, F), jnp.float32)
    out2 = match_forward(x2, y2, w1, b1, w2, b2)
    jax.block_until_ready(out2)
    ref2 = match_reference(x2, y2, w1, b1, w2, b2)
    assert out2.shape == (B2, 1)
    assert jnp.allclose(out2, ref2, atol=2e-3, rtol=2e-3), float(
        jnp.max(jnp.abs(out2 - ref2)))

    print("KERNEL_OK")
</pallas_src>

<mosaic_0001>
module attributes {stable_mosaic.version = 11 : i64} {
  func.func @match_kernel(%arg0: i32, %arg1: memref<8x200xf32, #tpu.memory_space<vmem>>, %arg2: memref<8x200xf32, #tpu.memory_space<vmem>>, %arg3: memref<4x200x256xbf16, #tpu.memory_space<vmem>>, %arg4: memref<1x256xf32, #tpu.memory_space<vmem>>, %arg5: memref<1x256xf32, #tpu.memory_space<vmem>>, %arg6: memref<1x1xf32, #tpu.memory_space<smem>>, %arg7: memref<1x1x8xf32, #tpu.memory_space<vmem>>) attributes {dimension_semantics = [#tpu.dimension_semantics<parallel>], iteration_bounds = array<i64: 1>, scalar_prefetch = 0 : i64, scratch_operands = 0 : i64, tpu.core_type = #tpu.core_type<tc>, window_params = [{transform_indices = @transform_0, window_bounds = array<i64: 8, 200>}, {transform_indices = @transform_1, window_bounds = array<i64: 8, 200>}, {pipeline_mode = #tpu.pipeline_mode<synchronous>, transform_indices = @transform_2, window_bounds = array<i64: 4, 200, 256>}, {pipeline_mode = #tpu.pipeline_mode<synchronous>, transform_indices = @transform_3, window_bounds = array<i64: 1, 256>}, {pipeline_mode = #tpu.pipeline_mode<synchronous>, transform_indices = @transform_4, window_bounds = array<i64: 1, 256>}, {transform_indices = @transform_5, window_bounds = array<i64: 1, 1>}, {transform_indices = @transform_6, window_bounds = array<i64: 1, 1, 8>}]} {
    %c0 = arith.constant 0 : index
    %c0_0 = arith.constant 0 : index
    %0 = vector.load %arg1[%c0, %c0_0] : memref<8x200xf32, #tpu.memory_space<vmem>>, vector<8x200xf32>
    %c0_1 = arith.constant 0 : index
    %c0_2 = arith.constant 0 : index
    %1 = vector.load %arg2[%c0_1, %c0_2] : memref<8x200xf32, #tpu.memory_space<vmem>>, vector<8x200xf32>
    %2 = arith.subf %0, %1 : vector<8x200xf32>
    %3 = math.absf %2 : vector<8x200xf32>
    %4 = arith.mulf %0, %1 : vector<8x200xf32>
    %5 = arith.truncf %0 : vector<8x200xf32> to vector<8x200xbf16>
    %6 = arith.truncf %1 : vector<8x200xf32> to vector<8x200xbf16>
    %7 = arith.truncf %3 : vector<8x200xf32> to vector<8x200xbf16>
    %8 = arith.truncf %4 : vector<8x200xf32> to vector<8x200xbf16>
    %c0_3 = arith.constant 0 : index
    %c0_4 = arith.constant 0 : index
    %c0_5 = arith.constant 0 : index
    %9 = vector.load %arg3[%c0_3, %c0_4, %c0_5] : memref<4x200x256xbf16, #tpu.memory_space<vmem>>, vector<1x200x256xbf16>
    %10 = vector.shape_cast %9 : vector<1x200x256xbf16> to vector<200x256xbf16>
    %cst = arith.constant dense<0.000000e+00> : vector<8x256xf32>
    %11 = tpu.matmul %5, %10, %cst {dimension_numbers = #tpu.dot_dimension_numbers<[1], [0], [0], [1], [0, 0, 1, 1], [], []>} : vector<8x200xbf16>, vector<200x256xbf16>, vector<8x256xf32> -> vector<8x256xf32>
    %c1 = arith.constant 1 : index
    %c0_6 = arith.constant 0 : index
    %c0_7 = arith.constant 0 : index
    %12 = vector.load %arg3[%c1, %c0_6, %c0_7] : memref<4x200x256xbf16, #tpu.memory_space<vmem>>, vector<1x200x256xbf16>
    %13 = vector.shape_cast %12 : vector<1x200x256xbf16> to vector<200x256xbf16>
    %cst_8 = arith.constant dense<0.000000e+00> : vector<8x256xf32>
    %14 = tpu.matmul %6, %13, %cst_8 {dimension_numbers = #tpu.dot_dimension_numbers<[1], [0], [0], [1], [0, 0, 1, 1], [], []>} : vector<8x200xbf16>, vector<200x256xbf16>, vector<8x256xf32> -> vector<8x256xf32>
    %15 = arith.addf %11, %14 : vector<8x256xf32>
    %c2 = arith.constant 2 : index
    %c0_9 = arith.constant 0 : index
    %c0_10 = arith.constant 0 : index
    %16 = vector.load %arg3[%c2, %c0_9, %c0_10] : memref<4x200x256xbf16, #tpu.memory_space<vmem>>, vector<1x200x256xbf16>
    %17 = vector.shape_cast %16 : vector<1x200x256xbf16> to vector<200x256xbf16>
    %cst_11 = arith.constant dense<0.000000e+00> : vector<8x256xf32>
    %18 = tpu.matmul %7, %17, %cst_11 {dimension_numbers = #tpu.dot_dimension_numbers<[1], [0], [0], [1], [0, 0, 1, 1], [], []>} : vector<8x200xbf16>, vector<200x256xbf16>, vector<8x256xf32> -> vector<8x256xf32>
    %19 = arith.addf %15, %18 : vector<8x256xf32>
    %c3 = arith.constant 3 : index
    %c0_12 = arith.constant 0 : index
    %c0_13 = arith.constant 0 : index
    %20 = vector.load %arg3[%c3, %c0_12, %c0_13] : memref<4x200x256xbf16, #tpu.memory_space<vmem>>, vector<1x200x256xbf16>
    %21 = vector.shape_cast %20 : vector<1x200x256xbf16> to vector<200x256xbf16>
    %cst_14 = arith.constant dense<0.000000e+00> : vector<8x256xf32>
    %22 = tpu.matmul %8, %21, %cst_14 {dimension_numbers = #tpu.dot_dimension_numbers<[1], [0], [0], [1], [0, 0, 1, 1], [], []>} : vector<8x200xbf16>, vector<200x256xbf16>, vector<8x256xf32> -> vector<8x256xf32>
    %23 = arith.addf %19, %22 : vector<8x256xf32>
    %c0_15 = arith.constant 0 : index
    %c0_16 = arith.constant 0 : index
    %24 = vector.load %arg4[%c0_15, %c0_16] : memref<1x256xf32, #tpu.memory_space<vmem>>, vector<1x256xf32>
    %25 = vector.broadcast %24 : vector<1x256xf32> to vector<8x256xf32>
    %26 = arith.addf %23, %25 : vector<8x256xf32>
    %cst_17 = arith.constant 0.000000e+00 : f32
    %27 = vector.broadcast %cst_17 : f32 to vector<8x256xf32>
    %28 = arith.maximumf %26, %27 : vector<8x256xf32>
    %c0_18 = arith.constant 0 : index
    %c0_19 = arith.constant 0 : index
    %29 = vector.load %arg5[%c0_18, %c0_19] : memref<1x256xf32, #tpu.memory_space<vmem>>, vector<1x256xf32>
    %30 = vector.broadcast %29 : vector<1x256xf32> to vector<8x256xf32>
    %31 = arith.mulf %28, %30 : vector<8x256xf32>
    %cst_20 = arith.constant dense<0.000000e+00> : vector<8xf32>
    %32 = vector.multi_reduction <add>, %31, %cst_20 [1] : vector<8x256xf32> to vector<8xf32>
    %33 = vector.shape_cast %32 : vector<8xf32> to vector<8x1xf32>
    %c0_21 = arith.constant 0 : index
    %c0_22 = arith.constant 0 : index
    %34 = memref.load %arg6[%c0_21, %c0_22] : memref<1x1xf32, #tpu.memory_space<smem>>
    %35 = vector.broadcast %34 : f32 to vector<8x1xf32>
    %36 = arith.addf %33, %35 : vector<8x1xf32>
    %37 = vector.shape_cast %36 : vector<8x1xf32> to vector<1x1x8xf32>
    %c0_23 = arith.constant 0 : index
    %c0_24 = arith.constant 0 : index
    %c0_25 = arith.constant 0 : index
    %38 = vector.load %arg7[%c0_23, %c0_24, %c0_25] : memref<1x1x8xf32, #tpu.memory_space<vmem>>, vector<1x1x8xf32>
    tpu.vector_store %arg7[%c0_23, %c0_24, %c0_25], %37 {strides = array<i32>} : memref<1x1x8xf32, #tpu.memory_space<vmem>>, vector<1x1x8xf32>,
    return
  }
  func.func @transform_0(%arg0: i32) -> (i32, i32) {
    %c0_i32 = arith.constant 0 : i32
    %c0_i32_0 = arith.constant 0 : i32
    return %arg0, %c0_i32 : i32, i32
  }
  func.func @transform_1(%arg0: i32) -> (i32, i32) {
    %c0_i32 = arith.constant 0 : i32
    %c0_i32_0 = arith.constant 0 : i32
    return %arg0, %c0_i32 : i32, i32
  }
  func.func @transform_2(%arg0: i32) -> (i32, i32, i32) {
    %c0_i32 = arith.constant 0 : i32
    %c0_i32_0 = arith.constant 0 : i32
    %c0_i32_1 = arith.constant 0 : i32
    %c0_i32_2 = arith.constant 0 : i32
    return %c0_i32, %c0_i32_0, %c0_i32_1 : i32, i32, i32
  }
  func.func @transform_3(%arg0: i32) -> (i32, i32) {
    %c0_i32 = arith.constant 0 : i32
    %c0_i32_0 = arith.constant 0 : i32
    %c0_i32_1 = arith.constant 0 : i32
    return %c0_i32, %c0_i32_0 : i32, i32
  }
  func.func @transform_4(%arg0: i32) -> (i32, i32) {
    %c0_i32 = arith.constant 0 : i32
    %c0_i32_0 = arith.constant 0 : i32
    %c0_i32_1 = arith.constant 0 : i32
    return %c0_i32, %c0_i32_0 : i32, i32
  }
  func.func @transform_5(%arg0: i32) -> (i32, i32) {
    %c0_i32 = arith.constant 0 : i32
    %c0_i32_0 = arith.constant 0 : i32
    %c0_i32_1 = arith.constant 0 : i32
    return %c0_i32, %c0_i32_0 : i32, i32
  }
  func.func @transform_6(%arg0: i32) -> (i32, i32, i32) {
    %c0_i32 = arith.constant 0 : i32
    %c0_i32_0 = arith.constant 0 : i32
    %c0_i32_1 = arith.constant 0 : i32
    return %arg0, %c0_i32, %c0_i32_0 : i32, i32, i32
  }
}

</mosaic_0001>

<llo_original>
// kernel: tpu_custom_call.1
$region0: #{tpu_custom_call.1}
  #allocation0 [shape = 'u32[]', space=smem, size = 0x4, offset = 0x4, fixed_abs, tag = 'smem constant byte address 0x4 - core index']
  #allocation1 [shape = 'u32[144,128]{1,0:T(1,128)}', space=vmem, size = 0x12000, scoped, tag = 'internal scratch']
  #allocation2 [shape = 'f32[1,1]{1,0:T(1,128)S(6)}', space=smem, size = 0x200, scoped, tag = 'scoped memory for tpu_custom_call.1']
  %s0 = inlined_call_operand.hbm [shape: f32[8,200], index: 0, kind: input, shape index: {}]
  %s1 = inlined_call_operand.hbm [shape: f32[8,200], index: 1, kind: input, shape index: {}]
  %s2 = inlined_call_operand.hbm [shape: bf16[4,200,256], index: 2, kind: input, shape index: {}]
  %s3 = inlined_call_operand.vmem [shape: f32[1,256], index: 3, kind: input, shape index: {}]
  %s4 = inlined_call_operand.vmem [shape: f32[1,256], index: 4, kind: input, shape index: {}]
  %s5 = inlined_call_operand.<no memory space> [shape: f32[1,1], index: 5, kind: input, shape index: {}]
  %s6 = inlined_call_operand.hbm [shape: f32[1,1,8], index: 6, kind: output, shape index: {}]
  %s7 = sld [smem:[#allocation0]]
  $region46: #{tpu_custom_call.1} parent=0
    _
  %s9 = ssub.s32 1, %s7
  %s10 = scalar_select 0, %s9, %s7
  %11 = sst [smem:[#allocation2]] %s5
  $region1: #{tpu_custom_call.1} parent=0
    #allocation3 [shape = 'u8[8192]{0}', space=vmem, size = 0x2000, scoped, tag = 'input window, operand 0, single buffered']
    #allocation4 [shape = 's32[1]{0}', space=sflag, size = 0x4, scoped, tag = 'scoped memory for tpu_custom_call.1']
    #allocation5 [shape = 's32[1]{0}', space=sflag, size = 0x4, scoped, tag = 'scoped memory for tpu_custom_call.1']
    #allocation6 [shape = 'u8[8192]{0}', space=vmem, size = 0x2000, scoped, tag = 'input window, operand 1, single buffered']
    #allocation7 [shape = 's32[1]{0}', space=sflag, size = 0x4, scoped, tag = 'scoped memory for tpu_custom_call.1']
    #allocation8 [shape = 'u8[409600]{0}', space=vmem, size = 0x64000, scoped, tag = 'input window, operand 2, single buffered']
    #allocation9 [shape = 'u8[512]{0}', space=vmem, size = 0x400, scoped, tag = 'output window, operand 0, single buffered']
    %12 = vsyncpa [#allocation4], 0
    %13 = vsyncpa [#allocation7], 0
    %14 = vsyncpa [#allocation5], 0
    // Predicated region
    $region2: #{tpu_custom_call.1} parent=1 // pred_check
      _
    $region3: #{tpu_custom_call.1} parent=1 // pred_check_branch
      %16 = sbr.rel (0) target = $region5
    $region4: #{tpu_custom_call.1} parent=1 // pred_region
      %s18 = ssub.s32 256, 256
      %19 = vsyncadd [#allocation4], %s18
      %s21 = sshll.u32 [#allocation3], 4
      %s22 = int_to_ptr.vmem [resolvable:$true] %s21
      %24 = dma.hbm_to_vmem [thread:$0]  %s0, 256, %s22, [#allocation4]
    $region5: #{tpu_custom_call.1} parent=1 // pred_fallthru
      _
    // Predicated region
    $region6: #{tpu_custom_call.1} parent=1 // pred_check
      _
    $region7: #{tpu_custom_call.1} parent=1 // pred_check_branch
      %26 = sbr.rel (0) target = $region9
    $region8: #{tpu_custom_call.1} parent=1 // pred_region
      %s28 = ssub.s32 256, 256
      %29 = vsyncadd [#allocation7], %s28
      %s31 = sshll.u32 [#allocation6], 4
      %s32 = int_to_ptr.vmem [resolvable:$true] %s31
      %34 = dma.hbm_to_vmem [thread:$0]  %s1, 256, %s32, [#allocation7]
    $region9: #{tpu_custom_call.1} parent=1 // pred_fallthru
      _
    // Predicated region
    $region10: #{tpu_custom_call.1} parent=1 // pred_check
      _
    $region11: #{tpu_custom_call.1} parent=1 // pred_check_branch
      %36 = sbr.rel (0) target = $region13
    $region12: #{tpu_custom_call.1} parent=1 // pred_region
      %s38 = ssub.s32 12800, 12800
      %39 = vsyncadd [#allocation7], %s38
      %s40 = sshll.u32 [#allocation8], 4
      %s41 = int_to_ptr.vmem [resolvable:$true] %s40
      %46 = dma.hbm_to_vmem [thread:$0]  %s2, 12800, %s41, [#allocation7], 128, 128, 8
    $region13: #{tpu_custom_call.1} parent=1 // pred_fallthru
      _
    // Predicated region
    $region14: #{tpu_custom_call.1} parent=1 // pred_check
      _
    $region15: #{tpu_custom_call.1} parent=1 // pred_check_branch
      %48 = sbr.rel (0) target = $region17
    $region16: #{tpu_custom_call.1} parent=1 // pred_region
      _
    $region17: #{tpu_custom_call.1} parent=1 // pred_fallthru
      _
    // Predicated region
    $region18: #{tpu_custom_call.1} parent=1 // pred_check
      _
    $region19: #{tpu_custom_call.1} parent=1 // pred_check_branch
      %50 = sbr.rel (0) target = $region21
    $region20: #{tpu_custom_call.1} parent=1 // pred_region
      _
    $region21: #{tpu_custom_call.1} parent=1 // pred_fallthru
      _
    // Predicated region
    $region22: #{tpu_custom_call.1} parent=1 // pred_check
      _
    $region23: #{tpu_custom_call.1} parent=1 // pred_check_branch
      %52 = sbr.rel (0) target = $region25
    $region24: #{tpu_custom_call.1} parent=1 // pred_region
      _
    $region25: #{tpu_custom_call.1} parent=1 // pred_fallthru
      _
    // Predicated region
    $region26: #{tpu_custom_call.1} parent=1 // pred_check
      _
    $region27: #{tpu_custom_call.1} parent=1 // pred_check_branch
      %54 = sbr.rel (0) target = $region29
    $region28: #{tpu_custom_call.1} parent=1 // pred_region
      %55 = dma.done [#allocation4], 256
    $region29: #{tpu_custom_call.1} parent=1 // pred_fallthru
      _
    // Predicated region
    $region30: #{tpu_custom_call.1} parent=1 // pred_check
      _
    $region31: #{tpu_custom_call.1} parent=1 // pred_check_branch
      %57 = sbr.rel (0) target = $region33
    $region32: #{tpu_custom_call.1} parent=1 // pred_region
      %58 = dma.done [#allocation7], 256
    $region33: #{tpu_custom_call.1} parent=1 // pred_fallthru
      _
    // Predicated region
    $region34: #{tpu_custom_call.1} parent=1 // pred_check
      _
    $region35: #{tpu_custom_call.1} parent=1 // pred_check_branch
      %60 = sbr.rel (0) target = $region37
    $region36: #{tpu_custom_call.1} parent=1 // pred_region
      %61 = dma.done [#allocation7], 12800
    $region37: #{tpu_custom_call.1} parent=1 // pred_fallthru
      _
    %v63 = vld [vmem:[#allocation3] sm:$0xff]
    %v64 = vld [vmem:[#allocation3 + $0x8] sm:$0xff]
    %v65 = vld [vmem:[#allocation6] sm:$0xff]
    %v66 = vld [vmem:[#allocation6 + $0x8] sm:$0xff]
    %v67 = vsub.f32 %v63, %v65
    %v68 = vsub.f32 %v64, %v66
    %v69 = vand.u32 2147483647, %v67
    %v70 = vand.u32 2147483647, %v68
    %v71 = vmul.f32 %v63, %v65
    %v72 = vmul.f32 %v64, %v66
    %v73 = vpack.c.bf16 %v63, %v63
    %v74 = vpack.c.bf16 %v64, %v64
    %v75 = vpack.c.bf16 %v65, %v65
    %v76 = vpack.c.bf16 %v66, %v66
    %v77 = vpack.c.bf16 %v69, %v69
    %v78 = vpack.c.bf16 %v70, %v70
    %v79 = vpack.c.bf16 %v71, %v71
    %v80 = vpack.c.bf16 %v72, %v72
    %v81 = vld [vmem:[#allocation8] sm:$0xff]
    %v82 = vld [vmem:[#allocation8 + $0x8] sm:$0xff]
    %v83 = vld [vmem:[#allocation8 + $0x10] sm:$0xff]
    %v84 = vld [vmem:[#allocation8 + $0x18] sm:$0xff]
    %v85 = vld [vmem:[#allocation8 + $0x20] sm:$0xff]
    %v86 = vld [vmem:[#allocation8 + $0x28] sm:$0xff]
    %v87 = vld [vmem:[#allocation8 + $0x30] sm:$0xff]
    %v88 = vld [vmem:[#allocation8 + $0x38] sm:$0xff]
    %v89 = vld [vmem:[#allocation8 + $0x40] sm:$0xff]
    %v90 = vld [vmem:[#allocation8 + $0x48] sm:$0xff]
    %v91 = vld [vmem:[#allocation8 + $0x50] sm:$0xff]
    %v92 = vld [vmem:[#allocation8 + $0x58] sm:$0xff]
    %v93 = vld [vmem:[#allocation8 + $0x60] sm:$0xff]
    %v94 = vld [vmem:[#allocation8 + $0x68] sm:$0xff]
    %v95 = vld [vmem:[#allocation8 + $0x70] sm:$0xff]
    %v96 = vld [vmem:[#allocation8 + $0x78] sm:$0xff]
    %v97 = vld [vmem:[#allocation8 + $0x80] sm:$0xff]
    %v98 = vld [vmem:[#allocation8 + $0x88] sm:$0xff]
    %v99 = vld [vmem:[#allocation8 + $0x90] sm:$0xff]
    %v100 = vld [vmem:[#allocation8 + $0x98] sm:$0xff]
    %v101 = vld [vmem:[#allocation8 + $0xa0] sm:$0xff]
    %v102 = vld [vmem:[#allocation8 + $0xa8] sm:$0xff]
    %v103 = vld [vmem:[#allocation8 + $0xb0] sm:$0xff]
    %v104 = vld [vmem:[#allocation8 + $0xb8] sm:$0xff]
    %v105 = vld [vmem:[#allocation8 + $0xc0] sm:$0xff]
    %s106 = scalar_lea.vmem [#allocation8], 200
    %v107 = vld [vmem:[%s106] sm:$0xff]
    %v108 = vld [vmem:[%s106 + $0x8] sm:$0xff]
    %v109 = vld [vmem:[%s106 + $0x10] sm:$0xff]
    %v110 = vld [vmem:[%s106 + $0x18] sm:$0xff]
    %v111 = vld [vmem:[%s106 + $0x20] sm:$0xff]
    %v112 = vld [vmem:[%s106 + $0x28] sm:$0xff]
    %v113 = vld [vmem:[%s106 + $0x30] sm:$0xff]
    %v114 = vld [vmem:[%s106 + $0x38] sm:$0xff]
    %v115 = vld [vmem:[%s106 + $0x40] sm:$0xff]
    %v116 = vld [vmem:[%s106 + $0x48] sm:$0xff]
    %v117 = vld [vmem:[%s106 + $0x50] sm:$0xff]
    %v118 = vld [vmem:[%s106 + $0x58] sm:$0xff]
    %v119 = vld [vmem:[%s106 + $0x60] sm:$0xff]
    %v120 = vld [vmem:[%s106 + $0x68] sm:$0xff]
    %v121 = vld [vmem:[%s106 + $0x70] sm:$0xff]
    %v122 = vld [vmem:[%s106 + $0x78] sm:$0xff]
    %v123 = vld [vmem:[%s106 + $0x80] sm:$0xff]
    %v124 = vld [vmem:[%s106 + $0x88] sm:$0xff]
    %v125 = vld [vmem:[%s106 + $0x90] sm:$0xff]
    %v126 = vld [vmem:[%s106 + $0x98] sm:$0xff]
    %v127 = vld [vmem:[%s106 + $0xa0] sm:$0xff]
    %v128 = vld [vmem:[%s106 + $0xa8] sm:$0xff]
    %v129 = vld [vmem:[%s106 + $0xb0] sm:$0xff]
    %v130 = vld [vmem:[%s106 + $0xb8] sm:$0xff]
    %v131 = vld [vmem:[%s106 + $0xc0] sm:$0xff]
    %v157 = vunpack.c.l.b16 %v107
    %v158 = vunpack.c.h.b16 %v107
    %v159 = vunpack.c.l.b16 %v108
    %v160 = vunpack.c.h.b16 %v108
    %v161 = vunpack.c.l.b16 %v109
    %v162 = vunpack.c.h.b16 %v109
    %v163 = vunpack.c.l.b16 %v110
    %v164 = vunpack.c.h.b16 %v110
    %v165 = vunpack.c.l.b16 %v111
    %v166 = vunpack.c.h.b16 %v111
    %v167 = vunpack.c.l.b16 %v112
    %v168 = vunpack.c.h.b16 %v112
    %v169 = vunpack.c.l.b16 %v113
    %v170 = vunpack.c.h.b16 %v113
    %v171 = vunpack.c.l.b16 %v114
    %v172 = vunpack.c.h.b16 %v114
    %v173 = vunpack.c.l.b16 %v115
    %v174 = vunpack.c.h.b16 %v115
    %v175 = vunpack.c.l.b16 %v116
    %v176 = vunpack.c.h.b16 %v116
    %v177 = vunpack.c.l.b16 %v117
    %v178 = vunpack.c.h.b16 %v117
    %v179 = vunpack.c.l.b16 %v118
    %v180 = vunpack.c.h.b16 %v118
    %v181 = vunpack.c.l.b16 %v119
    %v182 = vunpack.c.h.b16 %v119
    %v183 = vunpack.c.l.b16 %v120
    %v184 = vunpack.c.h.b16 %v120
    %v185 = vunpack.c.l.b16 %v121
    %v186 = vunpack.c.h.b16 %v121
    %v187 = vunpack.c.l.b16 %v122
    %v188 = vunpack.c.h.b16 %v122
    %v189 = vunpack.c.l.b16 %v123
    %v190 = vunpack.c.h.b16 %v123
    %v191 = vunpack.c.l.b16 %v124
    %v192 = vunpack.c.h.b16 %v124
    %v193 = vunpack.c.l.b16 %v125
    %v194 = vunpack.c.h.b16 %v125
    %v195 = vunpack.c.l.b16 %v126
    %v196 = vunpack.c.h.b16 %v126
    %v197 = vunpack.c.l.b16 %v127
    %v198 = vunpack.c.h.b16 %v127
    %v199 = vunpack.c.l.b16 %v128
    %v200 = vunpack.c.h.b16 %v128
    %v201 = vunpack.c.l.b16 %v129
    %v202 = vunpack.c.h.b16 %v129
    %v203 = vunpack.c.l.b16 %v130
    %v204 = vunpack.c.h.b16 %v130
    %v205 = vunpack.c.l.b16 %v131
    %v206 = vunpack.c.h.b16 %v131
    %v207 = vpack.c.b16 %v159, %v157
    %v208 = vpack.c.b16 %v160, %v158
    %v209 = vpack.c.b16 %v163, %v161
    %v210 = vpack.c.b16 %v164, %v162
    %v211 = vpack.c.b16 %v167, %v165
    %v212 = vpack.c.b16 %v168, %v166
    %v213 = vpack.c.b16 %v171, %v169
    %v214 = vpack.c.b16 %v172, %v170
    %v215 = vpack.c.b16 %v175, %v173
    %v216 = vpack.c.b16 %v176, %v174
    %v217 = vpack.c.b16 %v179, %v177
    %v218 = vpack.c.b16 %v180, %v178
    %v219 = vpack.c.b16 %v183, %v181
    %v220 = vpack.c.b16 %v184, %v182
    %v221 = vpack.c.b16 %v187, %v185
    %v222 = vpack.c.b16 %v188, %v186
    %v223 = vpack.c.b16 %v191, %v189
    %v224 = vpack.c.b16 %v192, %v190
    %v225 = vpack.c.b16 %v195, %v193
    %v226 = vpack.c.b16 %v196, %v194
    %v227 = vpack.c.b16 %v199, %v197
    %v228 = vpack.c.b16 %v200, %v198
    %v229 = vpack.c.b16 %v203, %v201
    %v230 = vpack.c.b16 %v204, %v202
    %v231 = vpack.c.b16 %v205, %v205
    %v232 = vpack.c.b16 %v206, %v206
    %vm257 = vcmask 588800
    %v259 = vsel %vm257, %v76, 0
    %vm261 = vcmask 1043456
    %v263 = vsel %vm261, %v231, 0
    %v266 = vsel %vm261, %v232, 0
    %268 = vmatprep.subr.bf16.mxu0 %v222
    %269 = vmatpush1.bf16.msra.mxu0 %v221
    %270 = vmatprep.subr.bf16.mxu0 %v220
    %271 = vmatpush1.bf16.msra.mxu0 %v219
    %272 = vmatprep.subr.bf16.mxu0 %v218
    %273 = vmatpush1.bf16.msra.mxu0 %v217
    %274 = vmatprep.subr.bf16.mxu0 %v216
    %275 = vmatpush1.bf16.msra.mxu0 %v215
    %276 = vmatprep.subr.bf16.mxu0 %v214
    %277 = vmatpush1.bf16.msra.mxu0 %v213
    %278 = vmatprep.subr.bf16.mxu0 %v212
    %279 = vmatpush1.bf16.msra.mxu0 %v211
    %280 = vmatprep.subr.bf16.mxu0 %v210
    %281 = vmatpush1.bf16.msra.mxu0 %v209
    %282 = vmatprep.subr.bf16.mxu0 %v208
    %283 = vmatpush1.bf16.msra.mxu0 %v207
    %284 = vmatprep.subr.bf16.mxu0 0
    %285 = vmatpush2.bf16.msra.mxu0 0
    %286 = vmatprep.subr.bf16.mxu0 0
    %287 = vmatpush2.bf16.msra.mxu0 0
    %288 = vmatprep.subr.bf16.mxu0 0
    %289 = vmatpush2.bf16.msra.mxu0 0
    %290 = vmatprep.subr.bf16.mxu0 %v266
    %291 = vmatpush2.bf16.msra.mxu0 %v263
    %292 = vmatprep.subr.bf16.mxu0 %v230
    %293 = vmatpush2.bf16.msra.mxu0 %v229
    %294 = vmatprep.subr.bf16.mxu0 %v228
    %295 = vmatpush2.bf16.msra.mxu0 %v227
    %296 = vmatprep.subr.bf16.mxu0 %v226
    %297 = vmatpush2.bf16.msra.mxu0 %v225
    %298 = vmatprep.subr.bf16.mxu0 %v224
    %299 = vmatpush2.bf16.msra.mxu0 %v223
    %300 = vmatprep.mubr.bf16.mxu0 %v259
    %301 = vmatmul.mubr.bf16.gmra.mxu0 %v75
    %v302 = vpop.f32.mrf.mxu0
    %v303 = vadd.f32 0.0, %v302
    %v304 = vpop.f32.mrf.mxu0
    %v305 = vadd.f32 0.0, %v304
    %v306 = vpop.f32.mrf.mxu0
    %v307 = vpop.f32.mrf.mxu0
    %308 = vdwg.mxu0
    %v334 = vunpack.c.l.b16 %v81
    %v335 = vunpack.c.h.b16 %v81
    %v336 = vunpack.c.l.b16 %v82
    %v337 = vunpack.c.h.b16 %v82
    %v338 = vunpack.c.l.b16 %v83
    %v339 = vunpack.c.h.b16 %v83
    %v340 = vunpack.c.l.b16 %v84
    %v341 = vunpack.c.h.b16 %v84
    %v342 = vunpack.c.l.b16 %v85
    %v343 = vunpack.c.h.b16 %v85
    %v344 = vunpack.c.l.b16 %v86
    %v345 = vunpack.c.h.b16 %v86
    %v346 = vunpack.c.l.b16 %v87
    %v347 = vunpack.c.h.b16 %v87
    %v348 = vunpack.c.l.b16 %v88
    %v349 = vunpack.c.h.b16 %v88
    %v350 = vunpack.c.l.b16 %v89
    %v351 = vunpack.c.h.b16 %v89
    %v352 = vunpack.c.l.b16 %v90
    %v353 = vunpack.c.h.b16 %v90
    %v354 = vunpack.c.l.b16 %v91
    %v355 = vunpack.c.h.b16 %v91
    %v356 = vunpack.c.l.b16 %v92
    %v357 = vunpack.c.h.b16 %v92
    %v358 = vunpack.c.l.b16 %v93
    %v359 = vunpack.c.h.b16 %v93
    %v360 = vunpack.c.l.b16 %v94
    %v361 = vunpack.c.h.b16 %v94
    %v362 = vunpack.c.l.b16 %v95
    %v363 = vunpack.c.h.b16 %v95
    %v364 = vunpack.c.l.b16 %v96
    %v365 = vunpack.c.h.b16 %v96
    %v366 = vunpack.c.l.b16 %v97
    %v367 = vunpack.c.h.b16 %v97
    %v368 = vunpack.c.l.b16 %v98
    %v369 = vunpack.c.h.b16 %v98
    %v370 = vunpack.c.l.b16 %v99
    %v371 = vunpack.c.h.b16 %v99
    %v372 = vunpack.c.l.b16 %v100
    %v373 = vunpack.c.h.b16 %v100
    %v374 = vunpack.c.l.b16 %v101
    %v375 = vunpack.c.h.b16 %v101
    %v376 = vunpack.c.l.b16 %v102
    %v377 = vunpack.c.h.b16 %v102
    %v378 = vunpack.c.l.b16 %v103
    %v379 = vunpack.c.h.b16 %v103
    %v380 = vunpack.c.l.b16 %v104
    %v381 = vunpack.c.h.b16 %v104
    %v382 = vunpack.c.l.b16 %v105
    %v383 = vunpack.c.h.b16 %v105
    %v384 = vpack.c.b16 %v336, %v334
    %v385 = vpack.c.b16 %v337, %v335
    %v386 = vpack.c.b16 %v340, %v338
    %v387 = vpack.c.b16 %v341, %v339
    %v388 = vpack.c.b16 %v344, %v342
    %v389 = vpack.c.b16 %v345, %v343
    %v390 = vpack.c.b16 %v348, %v346
    %v391 = vpack.c.b16 %v349, %v347
    %v392 = vpack.c.b16 %v352, %v350
    %v393 = vpack.c.b16 %v353, %v351
    %v394 = vpack.c.b16 %v356, %v354
    %v395 = vpack.c.b16 %v357, %v355
    %v396 = vpack.c.b16 %v360, %v358
    %v397 = vpack.c.b16 %v361, %v359
    %v398 = vpack.c.b16 %v364, %v362
    %v399 = vpack.c.b16 %v365, %v363
    %v400 = vpack.c.b16 %v368, %v366
    %v401 = vpack.c.b16 %v369, %v367
    %v402 = vpack.c.b16 %v372, %v370
    %v403 = vpack.c.b16 %v373, %v371
    %v404 = vpack.c.b16 %v376, %v374
    %v405 = vpack.c.b16 %v377, %v375
    %v406 = vpack.c.b16 %v380, %v378
    %v407 = vpack.c.b16 %v381, %v379
    %v408 = vpack.c.b16 %v382, %v382
    %v409 = vpack.c.b16 %v383, %v383
    %v435 = vsel %vm257, %v74, 0
    %v438 = vsel %vm261, %v408, 0
    %v441 = vsel %vm261, %v409, 0
    %443 = vmatprep.subr.bf16.mxu0 %v399
    %444 = vmatpush1.bf16.msra.mxu0 %v398
    %445 = vmatprep.subr.bf16.mxu0 %v397
    %446 = vmatpush1.bf16.msra.mxu0 %v396
    %447 = vmatprep.subr.bf16.mxu0 %v395
    %448 = vmatpush1.bf16.msra.mxu0 %v394
    %449 = vmatprep.subr.bf16.mxu0 %v393
    %450 = vmatpush1.bf16.msra.mxu0 %v392
    %451 = vmatprep.subr.bf16.mxu0 %v391
    %452 = vmatpush1.bf16.msra.mxu0 %v390
    %453 = vmatprep.subr.bf16.mxu0 %v389
    %454 = vmatpush1.bf16.msra.mxu0 %v388
    %455 = vmatprep.subr.bf16.mxu0 %v387
    %456 = vmatpush1.bf16.msra.mxu0 %v386
    %457 = vmatprep.subr.bf16.mxu0 %v385
    %458 = vmatpush1.bf16.msra.mxu0 %v384
    %459 = vmatprep.subr.bf16.mxu0 0
    %460 = vmatpush2.bf16.msra.mxu0 0
    %461 = vmatprep.subr.bf16.mxu0 0
    %462 = vmatpush2.bf16.msra.mxu0 0
    %463 = vmatprep.subr.bf16.mxu0 0
    %464 = vmatpush2.bf16.msra.mxu0 0
    %465 = vmatprep.subr.bf16.mxu0 %v441
    %466 = vmatpush2.bf16.msra.mxu0 %v438
    %467 = vmatprep.subr.bf16.mxu0 %v407
    %468 = vmatpush2.bf16.msra.mxu0 %v406
    %469 = vmatprep.subr.bf16.mxu0 %v405
    %470 = vmatpush2.bf16.msra.mxu0 %v404
    %471 = vmatprep.subr.bf16.mxu0 %v403
    %472 = vmatpush2.bf16.msra.mxu0 %v402
    %473 = vmatprep.subr.bf16.mxu0 %v401
    %474 = vmatpush2.bf16.msra.mxu0 %v400
    %475 = vmatprep.mubr.bf16.mxu0 %v435
    %476 = vmatmul.mubr.bf16.gmra.mxu0 %v73
    %v477 = vpop.f32.mrf.mxu0
    %v478 = vadd.f32 %v303, %v477
    %v479 = vpop.f32.mrf.mxu0
    %v480 = vadd.f32 %v305, %v479
    %v481 = vpop.f32.mrf.mxu0
    %v482 = vpop.f32.mrf.mxu0
    %483 = vdwg.mxu0
    %s484 = scalar_lea.vmem [#allocation8], 400
    %v485 = vld [vmem:[%s484] sm:$0xff]
    %v486 = vld [vmem:[%s484 + $0x8] sm:$0xff]
    %v487 = vld [vmem:[%s484 + $0x10] sm:$0xff]
    %v488 = vld [vmem:[%s484 + $0x18] sm:$0xff]
    %v489 = vld [vmem:[%s484 + $0x20] sm:$0xff]
    %v490 = vld [vmem:[%s484 + $0x28] sm:$0xff]
    %v491 = vld [vmem:[%s484 + $0x30] sm:$0xff]
    %v492 = vld [vmem:[%s484 + $0x38] sm:$0xff]
    %v493 = vld [vmem:[%s484 + $0x40] sm:$0xff]
    %v494 = vld [vmem:[%s484 + $0x48] sm:$0xff]
    %v495 = vld [vmem:[%s484 + $0x50] sm:$0xff]
    %v496 = vld [vmem:[%s484 + $0x58] sm:$0xff]
    %v497 = vld [vmem:[%s484 + $0x60] sm:$0xff]
    %v498 = vld [vmem:[%s484 + $0x68] sm:$0xff]
    %v499 = vld [vmem:[%s484 + $0x70] sm:$0xff]
    %v500 = vld [vmem:[%s484 + $0x78] sm:$0xff]
    %v501 = vld [vmem:[%s484 + $0x80] sm:$0xff]
    %v502 = vld [vmem:[%s484 + $0x88] sm:$0xff]
    %v503 = vld [vmem:[%s484 + $0x90] sm:$0xff]
    %v504 = vld [vmem:[%s484 + $0x98] sm:$0xff]
    %v505 = vld [vmem:[%s484 + $0xa0] sm:$0xff]
    %v506 = vld [vmem:[%s484 + $0xa8] sm:$0xff]
    %v507 = vld [vmem:[%s484 + $0xb0] sm:$0xff]
    %v508 = vld [vmem:[%s484 + $0xb8] sm:$0xff]
    %v509 = vld [vmem:[%s484 + $0xc0] sm:$0xff]
    %v535 = vunpack.c.l.b16 %v485
    %v536 = vunpack.c.h.b16 %v485
    %v537 = vunpack.c.l.b16 %v486
    %v538 = vunpack.c.h.b16 %v486
    %v539 = vunpack.c.l.b16 %v487
    %v540 = vunpack.c.h.b16 %v487
    %v541 = vunpack.c.l.b16 %v488
    %v542 = vunpack.c.h.b16 %v488
    %v543 = vunpack.c.l.b16 %v489
    %v544 = vunpack.c.h.b16 %v489
    %v545 = vunpack.c.l.b16 %v490
    %v546 = vunpack.c.h.b16 %v490
    %v547 = vunpack.c.l.b16 %v491
    %v548 = vunpack.c.h.b16 %v491
    %v549 = vunpack.c.l.b16 %v492
    %v550 = vunpack.c.h.b16 %v492
    %v551 = vunpack.c.l.b16 %v493
    %v552 = vunpack.c.h.b16 %v493
    %v553 = vunpack.c.l.b16 %v494
    %v554 = vunpack.c.h.b16 %v494
    %v555 = vunpack.c.l.b16 %v495
    %v556 = vunpack.c.h.b16 %v495
    %v557 = vunpack.c.l.b16 %v496
    %v558 = vunpack.c.h.b16 %v496
    %v559 = vunpack.c.l.b16 %v497
    %v560 = vunpack.c.h.b16 %v497
    %v561 = vunpack.c.l.b16 %v498
    %v562 = vunpack.c.h.b16 %v498
    %v563 = vunpack.c.l.b16 %v499
    %v564 = vunpack.c.h.b16 %v499
    %v565 = vunpack.c.l.b16 %v500
    %v566 = vunpack.c.h.b16 %v500
    %v567 = vunpack.c.l.b16 %v501
    %v568 = vunpack.c.h.b16 %v501
    %v569 = vunpack.c.l.b16 %v502
    %v570 = vunpack.c.h.b16 %v502
    %v571 = vunpack.c.l.b16 %v503
    %v572 = vunpack.c.h.b16 %v503
    %v573 = vunpack.c.l.b16 %v504
    %v574 = vunpack.c.h.b16 %v504
    %v575 = vunpack.c.l.b16 %v505
    %v576 = vunpack.c.h.b16 %v505
    %v577 = vunpack.c.l.b16 %v506
    %v578 = vunpack.c.h.b16 %v506
    %v579 = vunpack.c.l.b16 %v507
    %v580 = vunpack.c.h.b16 %v507
    %v581 = vunpack.c.l.b16 %v508
    %v582 = vunpack.c.h.b16 %v508
    %v583 = vunpack.c.l.b16 %v509
    %v584 = vunpack.c.h.b16 %v509
    %v585 = vpack.c.b16 %v537, %v535
    %v586 = vpack.c.b16 %v538, %v536
    %v587 = vpack.c.b16 %v541, %v539
    %v588 = vpack.c.b16 %v542, %v540
    %v589 = vpack.c.b16 %v545, %v543
    %v590 = vpack.c.b16 %v546, %v544
    %v591 = vpack.c.b16 %v549, %v547
    %v592 = vpack.c.b16 %v550, %v548
    %v593 = vpack.c.b16 %v553, %v551
    %v594 = vpack.c.b16 %v554, %v552
    %v595 = vpack.c.b16 %v557, %v555
    %v596 = vpack.c.b16 %v558, %v556
    %v597 = vpack.c.b16 %v561, %v559
    %v598 = vpack.c.b16 %v562, %v560
    %v599 = vpack.c.b16 %v565, %v563
    %v600 = vpack.c.b16 %v566, %v564
    %v601 = vpack.c.b16 %v569, %v567
    %v602 = vpack.c.b16 %v570, %v568
    %v603 = vpack.c.b16 %v573, %v571
    %v604 = vpack.c.b16 %v574, %v572
    %v605 = vpack.c.b16 %v577, %v575
    %v606 = vpack.c.b16 %v578, %v576
    %v607 = vpack.c.b16 %v581, %v579
    %v608 = vpack.c.b16 %v582, %v580
    %v609 = vpack.c.b16 %v583, %v583
    %v610 = vpack.c.b16 %v584, %v584
    %v636 = vsel %vm257, %v78, 0
    %v639 = vsel %vm261, %v609, 0
    %v642 = vsel %vm261, %v610, 0
    %644 = vmatprep.subr.bf16.mxu0 %v600
    %645 = vmatpush1.bf16.msra.mxu0 %v599
    %646 = vmatprep.subr.bf16.mxu0 %v598
    %647 = vmatpush1.bf16.msra.mxu0 %v597
    %648 = vmatprep.subr.bf16.mxu0 %v596
    %649 = vmatpush1.bf16.msra.mxu0 %v595
    %650 = vmatprep.subr.bf16.mxu0 %v594
    %651 = vmatpush1.bf16.msra.mxu0 %v593
    %652 = vmatprep.subr.bf16.mxu0 %v592
    %653 = vmatpush1.bf16.msra.mxu0 %v591
    %654 = vmatprep.subr.bf16.mxu0 %v590
    %655 = vmatpush1.bf16.msra.mxu0 %v589
    %656 = vmatprep.subr.bf16.mxu0 %v588
    %657 = vmatpush1.bf16.msra.mxu0 %v587
    %658 = vmatprep.subr.bf16.mxu0 %v586
    %659 = vmatpush1.bf16.msra.mxu0 %v585
    %660 = vmatprep.subr.bf16.mxu0 0
    %661 = vmatpush2.bf16.msra.mxu0 0
    %662 = vmatprep.subr.bf16.mxu0 0
    %663 = vmatpush2.bf16.msra.mxu0 0
    %664 = vmatprep.subr.bf16.mxu0 0
    %665 = vmatpush2.bf16.msra.mxu0 0
    %666 = vmatprep.subr.bf16.mxu0 %v642
    %667 = vmatpush2.bf16.msra.mxu0 %v639
    %668 = vmatprep.subr.bf16.mxu0 %v608
    %669 = vmatpush2.bf16.msra.mxu0 %v607
    %670 = vmatprep.subr.bf16.mxu0 %v606
    %671 = vmatpush2.bf16.msra.mxu0 %v605
    %672 = vmatprep.subr.bf16.mxu0 %v604
    %673 = vmatpush2.bf16.msra.mxu0 %v603
    %674 = vmatprep.subr.bf16.mxu0 %v602
    %675 = vmatpush2.bf16.msra.mxu0 %v601
    %676 = vmatprep.mubr.bf16.mxu0 %v636
    %677 = vmatmul.mubr.bf16.gmra.mxu0 %v77
    %v678 = vpop.f32.mrf.mxu0
    %v679 = vadd.f32 0.0, %v678
    %v680 = vpop.f32.mrf.mxu0
    %v681 = vadd.f32 0.0, %v680
    %v682 = vpop.f32.mrf.mxu0
    %v683 = vpop.f32.mrf.mxu0
    %684 = vdwg.mxu0
    %v685 = vadd.f32 %v478, %v679
    %v686 = vadd.f32 %v480, %v681
    %s687 = scalar_lea.vmem [#allocation8], 600
    %v688 = vld [vmem:[%s687] sm:$0xff]
    %v689 = vld [vmem:[%s687 + $0x8] sm:$0xff]
    %v690 = vld [vmem:[%s687 + $0x10] sm:$0xff]
    %v691 = vld [vmem:[%s687 + $0x18] sm:$0xff]
    %v692 = vld [vmem:[%s687 + $0x20] sm:$0xff]
    %v693 = vld [vmem:[%s687 + $0x28] sm:$0xff]
    %v694 = vld [vmem:[%s687 + $0x30] sm:$0xff]
    %v695 = vld [vmem:[%s687 + $0x38] sm:$0xff]
    %v696 = vld [vmem:[%s687 + $0x40] sm:$0xff]
    %v697 = vld [vmem:[%s687 + $0x48] sm:$0xff]
    %v698 = vld [vmem:[%s687 + $0x50] sm:$0xff]
    %v699 = vld [vmem:[%s687 + $0x58] sm:$0xff]
    %v700 = vld [vmem:[%s687 + $0x60] sm:$0xff]
    %v701 = vld [vmem:[%s687 + $0x68] sm:$0xff]
    %v702 = vld [vmem:[%s687 + $0x70] sm:$0xff]
    %v703 = vld [vmem:[%s687 + $0x78] sm:$0xff]
    %v704 = vld [vmem:[%s687 + $0x80] sm:$0xff]
    %v705 = vld [vmem:[%s687 + $0x88] sm:$0xff]
    %v706 = vld [vmem:[%s687 + $0x90] sm:$0xff]
    %v707 = vld [vmem:[%s687 + $0x98] sm:$0xff]
    %v708 = vld [vmem:[%s687 + $0xa0] sm:$0xff]
    %v709 = vld [vmem:[%s687 + $0xa8] sm:$0xff]
    %v710 = vld [vmem:[%s687 + $0xb0] sm:$0xff]
    %v711 = vld [vmem:[%s687 + $0xb8] sm:$0xff]
    %v712 = vld [vmem:[%s687 + $0xc0] sm:$0xff]
    %v738 = vunpack.c.l.b16 %v688
    %v739 = vunpack.c.h.b16 %v688
    %v740 = vunpack.c.l.b16 %v689
    %v741 = vunpack.c.h.b16 %v689
    %v742 = vunpack.c.l.b16 %v690
    %v743 = vunpack.c.h.b16 %v690
    %v744 = vunpack.c.l.b16 %v691
    %v745 = vunpack.c.h.b16 %v691
    %v746 = vunpack.c.l.b16 %v692
    %v747 = vunpack.c.h.b16 %v692
    %v748 = vunpack.c.l.b16 %v693
    %v749 = vunpack.c.h.b16 %v693
    %v750 = vunpack.c.l.b16 %v694
    %v751 = vunpack.c.h.b16 %v694
    %v752 = vunpack.c.l.b16 %v695
    %v753 = vunpack.c.h.b16 %v695
    %v754 = vunpack.c.l.b16 %v696
    %v755 = vunpack.c.h.b16 %v696
    %v756 = vunpack.c.l.b16 %v697
    %v757 = vunpack.c.h.b16 %v697
    %v758 = vunpack.c.l.b16 %v698
    %v759 = vunpack.c.h.b16 %v698
    %v760 = vunpack.c.l.b16 %v699
    %v761 = vunpack.c.h.b16 %v699
    %v762 = vunpack.c.l.b16 %v700
    %v763 = vunpack.c.h.b16 %v700
    %v764 = vunpack.c.l.b16 %v701
    %v765 = vunpack.c.h.b16 %v701
    %v766 = vunpack.c.l.b16 %v702
    %v767 = vunpack.c.h.b16 %v702
    %v768 = vunpack.c.l.b16 %v703
    %v769 = vunpack.c.h.b16 %v703
    %v770 = vunpack.c.l.b16 %v704
    %v771 = vunpack.c.h.b16 %v704
    %v772 = vunpack.c.l.b16 %v705
    %v773 = vunpack.c.h.b16 %v705
    %v774 = vunpack.c.l.b16 %v706
    %v775 = vunpack.c.h.b16 %v706
    %v776 = vunpack.c.l.b16 %v707
    %v777 = vunpack.c.h.b16 %v707
    %v778 = vunpack.c.l.b16 %v708
    %v779 = vunpack.c.h.b16 %v708
    %v780 = vunpack.c.l.b16 %v709
    %v781 = vunpack.c.h.b16 %v709
    %v782 = vunpack.c.l.b16 %v710
    %v783 = vunpack.c.h.b16 %v710
    %v784 = vunpack.c.l.b16 %v711
    %v785 = vunpack.c.h.b16 %v711
    %v786 = vunpack.c.l.b16 %v712
    %v787 = vunpack.c.h.b16 %v712
    %v788 = vpack.c.b16 %v740, %v738
    %v789 = vpack.c.b16 %v741, %v739
    %v790 = vpack.c.b16 %v744, %v742
    %v791 = vpack.c.b16 %v745, %v743
    %v792 = vpack.c.b16 %v748, %v746
    %v793 = vpack.c.b16 %v749, %v747
    %v794 = vpack.c.b16 %v752, %v750
    %v795 = vpack.c.b16 %v753, %v751
    %v796 = vpack.c.b16 %v756, %v754
    %v797 = vpack.c.b16 %v757, %v755
    %v798 = vpack.c.b16 %v760, %v758
    %v799 = vpack.c.b16 %v761, %v759
    %v800 = vpack.c.b16 %v764, %v762
    %v801 = vpack.c.b16 %v765, %v763
    %v802 = vpack.c.b16 %v768, %v766
    %v803 = vpack.c.b16 %v769, %v767
    %v804 = vpack.c.b16 %v772, %v770
    %v805 = vpack.c.b16 %v773, %v771
    %v806 = vpack.c.b16 %v776, %v774
    %v807 = vpack.c.b16 %v777, %v775
    %v808 = vpack.c.b16 %v780, %v778
    %v809 = vpack.c.b16 %v781, %v779
    %v810 = vpack.c.b16 %v784, %v782
    %v811 = vpack.c.b16 %v785, %v783
    %v812 = vpack.c.b16 %v786, %v786
    %v813 = vpack.c.b16 %v787, %v787
    %v839 = vsel %vm257, %v80, 0
    %v842 = vsel %vm261, %v812, 0
    %v845 = vsel %vm261, %v813, 0
    %847 = vmatprep.subr.bf16.mxu0 %v803
    %848 = vmatpush1.bf16.msra.mxu0 %v802
    %849 = vmatprep.subr.bf16.mxu0 %v801
    %850 = vmatpush1.bf16.msra.mxu0 %v800
    %851 = vmatprep.subr.bf16.mxu0 %v799
    %852 = vmatpush1.bf16.msra.mxu0 %v798
    %853 = vmatprep.subr.bf16.mxu0 %v797
    %854 = vmatpush1.bf16.msra.mxu0 %v796
    %855 = vmatprep.subr.bf16.mxu0 %v795
    %856 = vmatpush1.bf16.msra.mxu0 %v794
    %857 = vmatprep.subr.bf16.mxu0 %v793
    %858 = vmatpush1.bf16.msra.mxu0 %v792
    %859 = vmatprep.subr.bf16.mxu0 %v791
    %860 = vmatpush1.bf16.msra.mxu0 %v790
    %861 = vmatprep.subr.bf16.mxu0 %v789
    %862 = vmatpush1.bf16.msra.mxu0 %v788
    %863 = vmatprep.subr.bf16.mxu0 0
    %864 = vmatpush2.bf16.msra.mxu0 0
    %865 = vmatprep.subr.bf16.mxu0 0
    %866 = vmatpush2.bf16.msra.mxu0 0
    %867 = vmatprep.subr.bf16.mxu0 0
    %868 = vmatpush2.bf16.msra.mxu0 0
    %869 = vmatprep.subr.bf16.mxu0 %v845
    %870 = vmatpush2.bf16.msra.mxu0 %v842
    %871 = vmatprep.subr.bf16.mxu0 %v811
    %872 = vmatpush2.bf16.msra.mxu0 %v810
    %873 = vmatprep.subr.bf16.mxu0 %v809
    %874 = vmatpush2.bf16.msra.mxu0 %v808
    %875 = vmatprep.subr.bf16.mxu0 %v807
    %876 = vmatpush2.bf16.msra.mxu0 %v806
    %877 = vmatprep.subr.bf16.mxu0 %v805
    %878 = vmatpush2.bf16.msra.mxu0 %v804
    %879 = vmatprep.mubr.bf16.mxu0 %v839
    %880 = vmatmul.mubr.bf16.gmra.mxu0 %v79
    %v881 = vpop.f32.mrf.mxu0
    %v882 = vadd.f32 0.0, %v881
    %v883 = vpop.f32.mrf.mxu0
    %v884 = vadd.f32 0.0, %v883
    %v885 = vpop.f32.mrf.mxu0
    %v886 = vpop.f32.mrf.mxu0
    %887 = vdwg.mxu0
    %v888 = vadd.f32 %v685, %v882
    %v889 = vadd.f32 %v686, %v884
    %v890 = vld [vmem:[%s3] sm:$0x3]
    %v892 = vlaneseq
    %v893 = vshrl.u32 %v892, 7
    %v894 = vsub.s32 0, %v893
    %v895 = vrot.slane %v890, %v894
    %v896 = vlaneseq
    %v897 = vshrl.u32 %v896, 7
    %v898 = vsub.s32 1, %v897
    %v899 = vrot.slane %v890, %v898
    %v902 = vadd.f32 %v888, %v895
    %v903 = vadd.f32 %v889, %v899
    %v904 = vmax.f32 %v902, 0.0
    %v905 = vmax.f32 %v903, 0.0
    %v906 = vld [vmem:[%s4] sm:$0x3]
    %v908 = vlaneseq
    %v909 = vshrl.u32 %v908, 7
    %v910 = vsub.s32 0, %v909
    %v911 = vrot.slane %v906, %v910
    %v912 = vlaneseq
    %v913 = vshrl.u32 %v912, 7
    %v914 = vsub.s32 1, %v913
    %v915 = vrot.slane %v906, %v914
    %v918 = vmul.f32 %v904, %v911
    %v919 = vmul.f32 %v905, %v915
    %v920 = vadd.f32 %v918, %v919
    %921 = vadd.xlane.f32.xlu0 %v920
    %v922 = vpop.xlane.xlu0 %921
    %s923 = sld [smem:[#allocation2]]
    %v924 = vstv %s923
    %v925 = vadd.f32 %v922, %v924
    %v927 = vlaneseq
    %v928 = vand.u32 %v927, 127
    %v929 = vlaneseq
    %v930 = vshrl.u32 %v929, 7
    %v931 = vsub.s32 %v928, %v930
    %v932 = vrot.slane %v925, %v931
    %vm934 = vcmask 57344
    %935 = vst.msk [vmem:[#allocation9] sm:$0x1] %vm934, %v932
    // Predicated region
    $region38: #{tpu_custom_call.1} parent=1 // pred_check
      _
    $region39: #{tpu_custom_call.1} parent=1 // pred_check_branch
      %937 = sbr.rel (0) target = $region41
    $region40: #{tpu_custom_call.1} parent=1 // pred_region
      %s939 = ssub.s32 16, 16
      %940 = vsyncadd [#allocation5], %s939
      %s942 = sshll.u32 [#allocation9], 4
      %s943 = int_to_ptr.vmem [resolvable:$true] %s942
      %945 = dma.vmem_to_hbm [thread:$0]  %s943, 16, %s6, [#allocation5]
    $region41: #{tpu_custom_call.1} parent=1 // pred_fallthru
      _
    // Predicated region
    $region42: #{tpu_custom_call.1} parent=1 // pred_check
      _
    $region43: #{tpu_custom_call.1} parent=1 // pred_check_branch
      %947 = sbr.rel (0) target = $region45
    $region44: #{tpu_custom_call.1} parent=1 // pred_region
      %948 = dma.done [#allocation5], 16
    $region45: #{tpu_custom_call.1} parent=1 // pred_fallthru
      _
    %949 = vsyncpa [#allocation4], 1
    %950 = vsyncpa [#allocation7], 1
    %951 = vsyncpa [#allocation5], 1

</llo_original>
